<compile_context>
chip_gen: v7x
topology: tpu7x:2x2x1
jax: 0.10.0
libtpu: 0.0.40
codegen_flags: <defaults>
</compile_context>

<pallas_src>
import math

import jax
import jax.numpy as jnp
from jax import lax
from jax.experimental import pallas as pl
from jax.experimental.pallas import tpu as pltpu

# ---- model hyperparameters (small, consistent with the module) ----
BATCH = 2
SEQ = 8
EMBED = 32
NUM_HEADS = 4
HEAD_DIM = EMBED // NUM_HEADS
FF_DIM = EMBED * 4          # 128
LANES = 128                 # lane width of the packed constant/weight slab
EPS = 1e-5
NEG_INF = -1e30

# Slab row offsets (all multiples of 8 -> every slice is sublane-aligned, lane 0).
R_WQKV = 0                          # (D, 3D)   fused QKV weight (Q pre-scaled)
R_WO = 32                           # (D, D)    attention output projection
R_W1 = 64                           # (D, F)    FFN up projection
R_SEL = 96                          # (H*S, D)  block-diagonal head selector
R_MASK = 128                        # (H*S, S)  additive causal mask, tiled per head
R_VEC = 160                         # 8 rows of packed LN scales / biases
SLAB_ROWS = 168


def _layernorm(v, w, b):
    # One-pass variance: sum(x) and sum(x*x) are independent reductions.
    inv_n = 1.0 / v.shape[-1]
    s1 = jnp.sum(v, axis=-1, keepdims=True)
    s2 = jnp.sum(v * v, axis=-1, keepdims=True)
    mu = s1 * inv_n
    var = s2 * inv_n - mu * mu
    return (v - mu) * lax.rsqrt(var + EPS) * w + b


def _block_kernel(x_ref, slab_ref, w2_ref, o_ref):
    B, S, D, H, F = BATCH, SEQ, EMBED, NUM_HEADS, FF_DIM

    x2 = x_ref[...]                                    # (B*S, D) fused batch/seq slab

    # ---- packed constants: one (8,128) row block, one vector per sublane row ----
    vec = slab_ref[R_VEC:R_VEC + 8, :]
    ln1_w, ln1_b = vec[0:1, 0:D], vec[1:2, 0:D]
    ln2_w, ln2_b = vec[2:3, 0:D], vec[3:4, 0:D]
    bqkv = vec[4:5, 0:3 * D]                           # Q-part already scaled by 1/sqrt(hd)
    bo = vec[5:6, 0:D]
    b1 = vec[6:7, 0:F]
    b2 = vec[7:8, 0:D]

    sel = slab_ref[R_SEL:R_SEL + H * S, 0:D]           # (H*S, D) block-diag head selector
    sel4 = sel.reshape(H, S, D)                        # second-minor split (S=8) -> free
    cmask = slab_ref[R_MASK:R_MASK + H * S, 0:S]       # (H*S, S) additive causal mask

    # ---- LN1 on the fused slab ----
    h = _layernorm(x2, ln1_w, ln1_b)

    # ---- fused QKV projection: one MXU op (scale folded into Q columns/bias) ----
    qkv = jnp.dot(h, slab_ref[R_WQKV:R_WQKV + D, 0:3 * D],
                  preferred_element_type=jnp.float32) + bqkv        # (B*S, 3D)

    q = qkv[:, 0:D].reshape(B, S, D)
    k = qkv[:, D:2 * D].reshape(B, S, D)
    v = qkv[:, 2 * D:3 * D].reshape(B, S, D)

    # ---- all-heads-at-once attention (2 dot_generals + 1 softmax, no scratch) ----
    # rows n = h*S + s carry head h's query with non-head columns zeroed.
    qrep = (q[:, None, :, :] * sel4[None]).reshape(B, H * S, D)     # (B, H*S, D)
    s_bnk = jnp.einsum('bnd,bkd->bnk', qrep, k,
                       preferred_element_type=jnp.float32)          # (B, H*S, S)
    s_bnk = s_bnk + cmask                                           # additive causal mask
    m = jnp.max(s_bnk, axis=-1, keepdims=True)
    e = jnp.exp(s_bnk - m)
    p = e * pl.reciprocal(jnp.sum(e, axis=-1, keepdims=True), approx=True)
    ctx = jnp.einsum('bnk,bkd->bnd', p, v,
                     preferred_element_type=jnp.float32)            # (B, H*S, D)
    # keep only each head's own column block and fold the head axis back in
    ctx = (ctx.reshape(B, H, S, D) * sel4[None]).sum(axis=1)        # (B, S, D)
    ctx = ctx.reshape(B * S, D)

    # ---- output projection + residual (attn dropout = identity in eval) ----
    attn = jnp.dot(ctx, slab_ref[R_WO:R_WO + D, 0:D],
                   preferred_element_type=jnp.float32) + bo
    x1 = x2 + attn

    # ---- LN2 + FFN + residual (FFN dropout = identity in eval) ----
    h2 = _layernorm(x1, ln2_w, ln2_b)
    ff = jnp.dot(h2, slab_ref[R_W1:R_W1 + D, :],
                 preferred_element_type=jnp.float32) + b1
    ff = jnp.maximum(ff, 0.0)
    ff = jnp.dot(ff, w2_ref[...], preferred_element_type=jnp.float32) + b2
    o_ref[...] = x1 + ff


def transformer_block(x, packed):
    """x: (B, S, D) fp32.  packed: (slab, w2) from pack_params()."""
    B, S, D = x.shape
    slab, w2 = packed
    x2 = x.reshape(B * S, D)            # contiguous reshape outside the kernel (free)
    out2 = pl.pallas_call(
        _block_kernel,
        out_shape=jax.ShapeDtypeStruct((B * S, D), jnp.float32),
        # gridless single program; whole-array VMEM blocks (problem is ~100 KB)
        in_specs=[pl.BlockSpec(memory_space=pltpu.MemorySpace.VMEM)] * 3,
        out_specs=pl.BlockSpec(memory_space=pltpu.MemorySpace.VMEM),
    )(x2, slab, w2)
    return out2.reshape(B, S, D)


def init_raw_params(key):
    """PyTorch-equivalent parameters. Matmul weights stored as (in, out): y = x @ W + b."""
    ks = jax.random.split(key, 16)
    s = 0.05
    D, F = EMBED, FF_DIM
    ln1_w = 1.0 + s * jax.random.normal(ks[0], (1, D), jnp.float32)
    ln1_b = s * jax.random.normal(ks[1], (1, D), jnp.float32)
    wq = s * jax.random.normal(ks[2], (D, D), jnp.float32)
    wk = s * jax.random.normal(ks[3], (D, D), jnp.float32)
    wv = s * jax.random.normal(ks[4], (D, D), jnp.float32)
    bq = s * jax.random.normal(ks[5], (1, D), jnp.float32)
    bk = s * jax.random.normal(ks[6], (1, D), jnp.float32)
    bv = s * jax.random.normal(ks[7], (1, D), jnp.float32)
    wo = s * jax.random.normal(ks[8], (D, D), jnp.float32)
    bo = s * jax.random.normal(ks[9], (1, D), jnp.float32)
    ln2_w = 1.0 + s * jax.random.normal(ks[10], (1, D), jnp.float32)
    ln2_b = s * jax.random.normal(ks[11], (1, D), jnp.float32)
    w1 = s * jax.random.normal(ks[12], (D, F), jnp.float32)
    b1 = s * jax.random.normal(ks[13], (1, F), jnp.float32)
    w2 = s * jax.random.normal(ks[14], (F, D), jnp.float32)
    b2 = s * jax.random.normal(ks[15], (1, D), jnp.float32)
    return (ln1_w, ln1_b, wq, bq, wk, bk, wv, bv, wo, bo,
            ln2_w, ln2_b, w1, b1, w2, b2)


def pack_params(raw):
    """Fuse QKV, fold the attention scale, and pack everything lane-aligned into
    one (168, 128) slab (wqkv | wo | w1 | head-selector | causal mask | vectors),
    plus the (F, D) FFN down-projection kept in its natural orientation."""
    (ln1_w, ln1_b, wq, bq, wk, bk, wv, bv, wo, bo,
     ln2_w, ln2_b, w1, b1, w2, b2) = raw
    D, F, H, S, hd = EMBED, FF_DIM, NUM_HEADS, SEQ, HEAD_DIM
    scale = 1.0 / math.sqrt(hd)

    def pad_lanes(a):
        return jnp.pad(a, ((0, 0), (0, LANES - a.shape[1])))

    wqkv = jnp.concatenate([wq * scale, wk, wv], axis=1)                     # (D, 3D)
    bqkv = jnp.concatenate([bq * scale, bk, bv], axis=1)                     # (1, 3D)
    # block-diagonal head selector: row h*S+s selects columns h*hd..(h+1)*hd-1
    sel = jnp.kron(jnp.eye(H, dtype=jnp.float32),
                   jnp.ones((S, hd), jnp.float32))                           # (H*S, D)
    causal = jnp.where(jnp.triu(jnp.ones((S, S), bool), k=1),
                       jnp.float32(NEG_INF), jnp.float32(0.0))               # (S, S)
    cmask = jnp.tile(causal, (H, 1))                                         # (H*S, S)

    vec_rows = [ln1_w, ln1_b, ln2_w, ln2_b, bqkv, bo, b1, b2]
    vec = jnp.concatenate([pad_lanes(r) for r in vec_rows], axis=0)          # (8, 128)

    slab = jnp.concatenate([
        pad_lanes(wqkv),      # rows   0.. 31
        pad_lanes(wo),        # rows  32.. 63
        w1,                   # rows  64.. 95 (already 128 wide)
        pad_lanes(sel),       # rows  96..127
        pad_lanes(cmask),     # rows 128..159
        vec,                  # rows 160..167
    ], axis=0)
    assert slab.shape == (SLAB_ROWS, LANES)
    return slab, w2


def reference_block(x, raw):
    """Pure-JAX reference of the PyTorch forward (eval mode), from the raw params."""
    (ln1_w, ln1_b, wq, bq, wk, bk, wv, bv, wo, bo,
     ln2_w, ln2_b, w1, b1, w2, b2) = raw
    B, S, D = x.shape
    H, hd = NUM_HEADS, HEAD_DIM

    def ln(v, w, b):
        mu = v.mean(-1, keepdims=True)
        var = ((v - mu) ** 2).mean(-1, keepdims=True)
        return (v - mu) / jnp.sqrt(var + EPS) * w + b

    h = ln(x, ln1_w[0], ln1_b[0])
    q = h @ wq + bq[0]
    k = h @ wk + bk[0]
    v = h @ wv + bv[0]
    qh = q.reshape(B, S, H, hd).transpose(0, 2, 1, 3) / math.sqrt(hd)
    kh = k.reshape(B, S, H, hd).transpose(0, 2, 1, 3)
    vh = v.reshape(B, S, H, hd).transpose(0, 2, 1, 3)
    s = jnp.einsum('bhqd,bhkd->bhqk', qh, kh)
    mask = jnp.triu(jnp.ones((S, S), bool), k=1)
    s = jnp.where(mask, -jnp.inf, s)
    p = jax.nn.softmax(s, axis=-1)
    ctx = jnp.einsum('bhqk,bhkd->bhqd', p, vh).transpose(0, 2, 1, 3).reshape(B, S, D)
    attn = ctx @ wo + bo[0]
    x1 = x + attn
    h2 = ln(x1, ln2_w[0], ln2_b[0])
    ff = jnp.maximum(h2 @ w1 + b1[0], 0.0) @ w2 + b2[0]
    return x1 + ff


if __name__ == "__main__":
    key = jax.random.PRNGKey(0)
    k_x, k_p = jax.random.split(key)
    x = jax.random.normal(k_x, (BATCH, SEQ, EMBED), jnp.float32)
    raw = init_raw_params(k_p)
    packed = pack_params(raw)

    out = transformer_block(x, packed)
    out = jax.block_until_ready(out)
    assert out.shape == (BATCH, SEQ, EMBED)
    assert bool(jnp.all(jnp.isfinite(out)))

    ref = reference_block(x, raw)
    # 1e-3 tolerance: approx EUP reciprocal in the softmax and the one-pass LN
    # variance perturb numerics slightly vs. the exact reference.
    assert bool(jnp.allclose(out, ref, atol=1e-3, rtol=1e-3)), \
        ("max abs err", float(jnp.max(jnp.abs(out - ref))))
    # TODO(synk): dropout is treated as identity (eval mode); training-time
    # stochastic dropout would use pltpu.prng_seed / pltpu.prng_random_bits.
    print("KERNEL_OK")
</pallas_src>

<mosaic_0001>
module attributes {stable_mosaic.version = 11 : i64} {
  func.func @_block_kernel(%arg0: memref<16x32xf32, #tpu.memory_space<vmem>>, %arg1: memref<168x128xf32, #tpu.memory_space<vmem>>, %arg2: memref<128x32xf32, #tpu.memory_space<vmem>>, %arg3: memref<16x32xf32, #tpu.memory_space<vmem>>) attributes {dimension_semantics = [], scalar_prefetch = 0 : i64, scratch_operands = 0 : i64, tpu.core_type = #tpu.core_type<tc>} {
    %c0 = arith.constant 0 : index
    %c0_0 = arith.constant 0 : index
    %0 = vector.load %arg0[%c0, %c0_0] : memref<16x32xf32, #tpu.memory_space<vmem>>, vector<16x32xf32>
    %c160 = arith.constant 160 : index
    %c0_1 = arith.constant 0 : index
    %1 = vector.load %arg1[%c160, %c0_1] : memref<168x128xf32, #tpu.memory_space<vmem>>, vector<8x128xf32>
    %2 = vector.extract_strided_slice %1 {offsets = [0, 0], sizes = [1, 32], strides = [1, 1]} : vector<8x128xf32> to vector<1x32xf32>
    %3 = vector.extract_strided_slice %1 {offsets = [1, 0], sizes = [1, 32], strides = [1, 1]} : vector<8x128xf32> to vector<1x32xf32>
    %4 = vector.extract_strided_slice %1 {offsets = [2, 0], sizes = [1, 32], strides = [1, 1]} : vector<8x128xf32> to vector<1x32xf32>
    %5 = vector.extract_strided_slice %1 {offsets = [3, 0], sizes = [1, 32], strides = [1, 1]} : vector<8x128xf32> to vector<1x32xf32>
    %6 = vector.extract_strided_slice %1 {offsets = [4, 0], sizes = [1, 96], strides = [1, 1]} : vector<8x128xf32> to vector<1x96xf32>
    %7 = vector.extract_strided_slice %1 {offsets = [5, 0], sizes = [1, 32], strides = [1, 1]} : vector<8x128xf32> to vector<1x32xf32>
    %8 = vector.extract_strided_slice %1 {offsets = [6, 0], sizes = [1, 128], strides = [1, 1]} : vector<8x128xf32> to vector<1x128xf32>
    %9 = vector.extract_strided_slice %1 {offsets = [7, 0], sizes = [1, 32], strides = [1, 1]} : vector<8x128xf32> to vector<1x32xf32>
    %c96 = arith.constant 96 : index
    %c0_2 = arith.constant 0 : index
    %10 = vector.load %arg1[%c96, %c0_2] : memref<168x128xf32, #tpu.memory_space<vmem>>, vector<32x32xf32>
    %11 = vector.shape_cast %10 : vector<32x32xf32> to vector<4x8x32xf32>
    %c128 = arith.constant 128 : index
    %c0_3 = arith.constant 0 : index
    %12 = vector.load %arg1[%c128, %c0_3] : memref<168x128xf32, #tpu.memory_space<vmem>>, vector<32x8xf32>
    %cst = arith.constant dense<0.000000e+00> : vector<16xf32>
    %13 = vector.multi_reduction <add>, %0, %cst [1] : vector<16x32xf32> to vector<16xf32>
    %14 = vector.shape_cast %13 : vector<16xf32> to vector<16x1xf32>
    %15 = arith.mulf %0, %0 : vector<16x32xf32>
    %cst_4 = arith.constant dense<0.000000e+00> : vector<16xf32>
    %16 = vector.multi_reduction <add>, %15, %cst_4 [1] : vector<16x32xf32> to vector<16xf32>
    %17 = vector.shape_cast %16 : vector<16xf32> to vector<16x1xf32>
    %cst_5 = arith.constant 3.125000e-02 : f32
    %18 = vector.broadcast %cst_5 : f32 to vector<16x1xf32>
    %19 = arith.mulf %14, %18 : vector<16x1xf32>
    %cst_6 = arith.constant 3.125000e-02 : f32
    %20 = vector.broadcast %cst_6 : f32 to vector<16x1xf32>
    %21 = arith.mulf %17, %20 : vector<16x1xf32>
    %22 = arith.mulf %19, %19 : vector<16x1xf32>
    %23 = arith.subf %21, %22 : vector<16x1xf32>
    %24 = vector.broadcast %19 : vector<16x1xf32> to vector<16x32xf32>
    %25 = arith.subf %0, %24 : vector<16x32xf32>
    %cst_7 = arith.constant 9.99999974E-6 : f32
    %26 = vector.broadcast %cst_7 : f32 to vector<16x1xf32>
    %27 = arith.addf %23, %26 : vector<16x1xf32>
    %28 = math.rsqrt %27 : vector<16x1xf32>
    %29 = vector.broadcast %28 : vector<16x1xf32> to vector<16x32xf32>
    %30 = arith.mulf %25, %29 : vector<16x32xf32>
    %31 = vector.broadcast %2 : vector<1x32xf32> to vector<16x32xf32>
    %32 = arith.mulf %30, %31 : vector<16x32xf32>
    %33 = vector.broadcast %3 : vector<1x32xf32> to vector<16x32xf32>
    %34 = arith.addf %32, %33 : vector<16x32xf32>
    %c0_8 = arith.constant 0 : index
    %c0_9 = arith.constant 0 : index
    %35 = vector.load %arg1[%c0_8, %c0_9] : memref<168x128xf32, #tpu.memory_space<vmem>>, vector<32x96xf32>
    %cst_10 = arith.constant dense<0.000000e+00> : vector<16x96xf32>
    %36 = tpu.matmul %34, %35, %cst_10 {dimension_numbers = #tpu.dot_dimension_numbers<[1], [0], [0], [1], [0, 0, 1, 1], [], []>} : vector<16x32xf32>, vector<32x96xf32>, vector<16x96xf32> -> vector<16x96xf32>
    %37 = vector.broadcast %6 : vector<1x96xf32> to vector<16x96xf32>
    %38 = arith.addf %36, %37 : vector<16x96xf32>
    %39 = vector.extract_strided_slice %38 {offsets = [0, 0], sizes = [16, 32], strides = [1, 1]} : vector<16x96xf32> to vector<16x32xf32>
    %40 = vector.shape_cast %39 : vector<16x32xf32> to vector<2x8x32xf32>
    %41 = vector.extract_strided_slice %38 {offsets = [0, 32], sizes = [16, 32], strides = [1, 1]} : vector<16x96xf32> to vector<16x32xf32>
    %42 = vector.shape_cast %41 : vector<16x32xf32> to vector<2x8x32xf32>
    %43 = vector.extract_strided_slice %38 {offsets = [0, 64], sizes = [16, 32], strides = [1, 1]} : vector<16x96xf32> to vector<16x32xf32>
    %44 = vector.shape_cast %43 : vector<16x32xf32> to vector<2x8x32xf32>
    %45 = vector.shape_cast %40 : vector<2x8x32xf32> to vector<2x1x8x32xf32>
    %46 = vector.shape_cast %11 : vector<4x8x32xf32> to vector<1x4x8x32xf32>
    %47 = vector.broadcast %45 : vector<2x1x8x32xf32> to vector<2x4x8x32xf32>
    %48 = vector.broadcast %46 : vector<1x4x8x32xf32> to vector<2x4x8x32xf32>
    %49 = arith.mulf %47, %48 : vector<2x4x8x32xf32>
    %50 = vector.shape_cast %49 : vector<2x4x8x32xf32> to vector<2x32x32xf32>
    "tpu.trace_start"() <{level = 10 : i32, message = "bnd,bkd->bnk"}> : () -> ()
    %cst_11 = arith.constant dense<0.000000e+00> : vector<2x32x8xf32>
    %51 = tpu.matmul %50, %42, %cst_11 {dimension_numbers = #tpu.dot_dimension_numbers<[2], [2], [1], [1], [0, 0, 0, 1, 1, 1], [0], [0]>} : vector<2x32x32xf32>, vector<2x8x32xf32>, vector<2x32x8xf32> -> vector<2x32x8xf32>
    "tpu.trace_stop"() : () -> ()
    %52 = vector.shape_cast %12 : vector<32x8xf32> to vector<1x32x8xf32>
    %53 = vector.broadcast %52 : vector<1x32x8xf32> to vector<2x32x8xf32>
    %54 = arith.addf %51, %53 : vector<2x32x8xf32>
    %cst_12 = arith.constant dense<0xFF800000> : vector<2x32xf32>
    %55 = vector.multi_reduction <maximumf>, %54, %cst_12 [2] : vector<2x32x8xf32> to vector<2x32xf32>
    %56 = vector.shape_cast %55 : vector<2x32xf32> to vector<2x32x1xf32>
    %57 = vector.broadcast %56 : vector<2x32x1xf32> to vector<2x32x8xf32>
    %58 = arith.subf %54, %57 : vector<2x32x8xf32>
    %59 = math.exp %58 : vector<2x32x8xf32>
    %cst_13 = arith.constant dense<0.000000e+00> : vector<2x32xf32>
    %60 = vector.multi_reduction <add>, %59, %cst_13 [2] : vector<2x32x8xf32> to vector<2x32xf32>
    %61 = vector.shape_cast %60 : vector<2x32xf32> to vector<2x32x1xf32>
    %62 = tpu.reciprocal %61 {approx = true} : vector<2x32x1xf32> -> vector<2x32x1xf32>
    %63 = vector.broadcast %62 : vector<2x32x1xf32> to vector<2x32x8xf32>
    %64 = arith.mulf %59, %63 : vector<2x32x8xf32>
    "tpu.trace_start"() <{level = 10 : i32, message = "bnk,bkd->bnd"}> : () -> ()
    %cst_14 = arith.constant dense<0.000000e+00> : vector<2x32x32xf32>
    %65 = tpu.matmul %64, %44, %cst_14 {dimension_numbers = #tpu.dot_dimension_numbers<[2], [1], [1], [2], [0, 0, 0, 1, 1, 2], [0], [0]>} : vector<2x32x8xf32>, vector<2x8x32xf32>, vector<2x32x32xf32> -> vector<2x32x32xf32>
    "tpu.trace_stop"() : () -> ()
    %66 = vector.shape_cast %65 : vector<2x32x32xf32> to vector<2x4x8x32xf32>
    %67 = vector.shape_cast %11 : vector<4x8x32xf32> to vector<1x4x8x32xf32>
    %68 = vector.broadcast %67 : vector<1x4x8x32xf32> to vector<2x4x8x32xf32>
    %69 = arith.mulf %66, %68 : vector<2x4x8x32xf32>
    %cst_15 = arith.constant dense<0.000000e+00> : vector<2x8x32xf32>
    %70 = vector.multi_reduction <add>, %69, %cst_15 [1] : vector<2x4x8x32xf32> to vector<2x8x32xf32>
    %71 = vector.shape_cast %70 : vector<2x8x32xf32> to vector<16x32xf32>
    %c32 = arith.constant 32 : index
    %c0_16 = arith.constant 0 : index
    %72 = vector.load %arg1[%c32, %c0_16] : memref<168x128xf32, #tpu.memory_space<vmem>>, vector<32x32xf32>
    %cst_17 = arith.constant dense<0.000000e+00> : vector<16x32xf32>
    %73 = tpu.matmul %71, %72, %cst_17 {dimension_numbers = #tpu.dot_dimension_numbers<[1], [0], [0], [1], [0, 0, 1, 1], [], []>} : vector<16x32xf32>, vector<32x32xf32>, vector<16x32xf32> -> vector<16x32xf32>
    %74 = vector.broadcast %7 : vector<1x32xf32> to vector<16x32xf32>
    %75 = arith.addf %73, %74 : vector<16x32xf32>
    %76 = arith.addf %0, %75 : vector<16x32xf32>
    %cst_18 = arith.constant dense<0.000000e+00> : vector<16xf32>
    %77 = vector.multi_reduction <add>, %76, %cst_18 [1] : vector<16x32xf32> to vector<16xf32>
    %78 = vector.shape_cast %77 : vector<16xf32> to vector<16x1xf32>
    %79 = arith.mulf %76, %76 : vector<16x32xf32>
    %cst_19 = arith.constant dense<0.000000e+00> : vector<16xf32>
    %80 = vector.multi_reduction <add>, %79, %cst_19 [1] : vector<16x32xf32> to vector<16xf32>
    %81 = vector.shape_cast %80 : vector<16xf32> to vector<16x1xf32>
    %cst_20 = arith.constant 3.125000e-02 : f32
    %82 = vector.broadcast %cst_20 : f32 to vector<16x1xf32>
    %83 = arith.mulf %78, %82 : vector<16x1xf32>
    %cst_21 = arith.constant 3.125000e-02 : f32
    %84 = vector.broadcast %cst_21 : f32 to vector<16x1xf32>
    %85 = arith.mulf %81, %84 : vector<16x1xf32>
    %86 = arith.mulf %83, %83 : vector<16x1xf32>
    %87 = arith.subf %85, %86 : vector<16x1xf32>
    %88 = vector.broadcast %83 : vector<16x1xf32> to vector<16x32xf32>
    %89 = arith.subf %76, %88 : vector<16x32xf32>
    %cst_22 = arith.constant 9.99999974E-6 : f32
    %90 = vector.broadcast %cst_22 : f32 to vector<16x1xf32>
    %91 = arith.addf %87, %90 : vector<16x1xf32>
    %92 = math.rsqrt %91 : vector<16x1xf32>
    %93 = vector.broadcast %92 : vector<16x1xf32> to vector<16x32xf32>
    %94 = arith.mulf %89, %93 : vector<16x32xf32>
    %95 = vector.broadcast %4 : vector<1x32xf32> to vector<16x32xf32>
    %96 = arith.mulf %94, %95 : vector<16x32xf32>
    %97 = vector.broadcast %5 : vector<1x32xf32> to vector<16x32xf32>
    %98 = arith.addf %96, %97 : vector<16x32xf32>
    %c64 = arith.constant 64 : index
    %c0_23 = arith.constant 0 : index
    %99 = vector.load %arg1[%c64, %c0_23] : memref<168x128xf32, #tpu.memory_space<vmem>>, vector<32x128xf32>
    %cst_24 = arith.constant dense<0.000000e+00> : vector<16x128xf32>
    %100 = tpu.matmul %98, %99, %cst_24 {dimension_numbers = #tpu.dot_dimension_numbers<[1], [0], [0], [1], [0, 0, 1, 1], [], []>} : vector<16x32xf32>, vector<32x128xf32>, vector<16x128xf32> -> vector<16x128xf32>
    %101 = vector.broadcast %8 : vector<1x128xf32> to vector<16x128xf32>
    %102 = arith.addf %100, %101 : vector<16x128xf32>
    %cst_25 = arith.constant 0.000000e+00 : f32
    %103 = vector.broadcast %cst_25 : f32 to vector<16x128xf32>
    %104 = arith.maximumf %102, %103 : vector<16x128xf32>
    %c0_26 = arith.constant 0 : index
    %c0_27 = arith.constant 0 : index
    %105 = vector.load %arg2[%c0_26, %c0_27] : memref<128x32xf32, #tpu.memory_space<vmem>>, vector<128x32xf32>
    %cst_28 = arith.constant dense<0.000000e+00> : vector<16x32xf32>
    %106 = tpu.matmul %104, %105, %cst_28 {dimension_numbers = #tpu.dot_dimension_numbers<[1], [0], [0], [1], [0, 0, 1, 1], [], []>} : vector<16x128xf32>, vector<128x32xf32>, vector<16x32xf32> -> vector<16x32xf32>
    %107 = vector.broadcast %9 : vector<1x32xf32> to vector<16x32xf32>
    %108 = arith.addf %106, %107 : vector<16x32xf32>
    %109 = arith.addf %76, %108 : vector<16x32xf32>
    %c0_29 = arith.constant 0 : index
    %c0_30 = arith.constant 0 : index
    %110 = vector.load %arg3[%c0_29, %c0_30] : memref<16x32xf32, #tpu.memory_space<vmem>>, vector<16x32xf32>
    tpu.vector_store %arg3[%c0_29, %c0_30], %109 {strides = array<i32>} : memref<16x32xf32, #tpu.memory_space<vmem>>, vector<16x32xf32>,
    return
  }
}

</mosaic_0001>

<llo_original>
// kernel: tpu_custom_call.1
$region0: #{tpu_custom_call.1}
  #allocation0 [shape = 'u32[]', space=smem, size = 0x4, offset = 0x4, fixed_abs, tag = 'smem constant byte address 0x4 - core index']
  #allocation1 [shape = 'u32[144,128]{1,0:T(1,128)}', space=vmem, size = 0x12000, scoped, tag = 'internal scratch']
  %s0 = inlined_call_operand.vmem [shape: f32[16,32], index: 0, kind: input, shape index: {}]
  %s1 = inlined_call_operand.hbm [shape: f32[168,128], index: 1, kind: input, shape index: {}]
  %s2 = inlined_call_operand.vmem [shape: f32[128,32], index: 2, kind: input, shape index: {}]
  %s3 = inlined_call_operand.hbm [shape: f32[16,32], index: 3, kind: output, shape index: {}]
  %s4 = sld [smem:[#allocation0]]
  $region26: #{tpu_custom_call.1} parent=0
    _
  %s6 = ssub.s32 1, %s4
  %s7 = scalar_select 0, %s6, %s4
  $region1: #{tpu_custom_call.1} parent=0
    #allocation2 [shape = 'u8[86016]{0}', space=vmem, size = 0x15000, scoped, tag = 'input window, operand 1, single buffered']
    #allocation3 [shape = 's32[1]{0}', space=sflag, size = 0x4, scoped, tag = 'scoped memory for tpu_custom_call.1']
    #allocation4 [shape = 's32[1]{0}', space=sflag, size = 0x4, scoped, tag = 'scoped memory for tpu_custom_call.1']
    #allocation5 [shape = 'u8[8192]{0}', space=vmem, size = 0x2000, scoped, tag = 'output window, operand 0, single buffered']
    %8 = vsyncpa [#allocation3], 0
    %9 = vsyncpa [#allocation4], 0
    // Predicated region
    $region2: #{tpu_custom_call.1} parent=1 // pred_check
      _
    $region3: #{tpu_custom_call.1} parent=1 // pred_check_branch
      %11 = sbr.rel (0) target = $region5
    $region4: #{tpu_custom_call.1} parent=1 // pred_region
      _
    $region5: #{tpu_custom_call.1} parent=1 // pred_fallthru
      _
    // Predicated region
    $region6: #{tpu_custom_call.1} parent=1 // pred_check
      _
    $region7: #{tpu_custom_call.1} parent=1 // pred_check_branch
      %13 = sbr.rel (0) target = $region9
    $region8: #{tpu_custom_call.1} parent=1 // pred_region
      %s15 = ssub.s32 2688, 2688
      %16 = vsyncadd [#allocation3], %s15
      %s17 = sshll.u32 [#allocation2], 4
      %s18 = int_to_ptr.vmem [resolvable:$true] %s17
      %23 = dma.hbm_to_vmem [thread:$0]  %s1, 2688, %s18, [#allocation3], 128, 128, 8
    $region9: #{tpu_custom_call.1} parent=1 // pred_fallthru
      _
    // Predicated region
    $region10: #{tpu_custom_call.1} parent=1 // pred_check
      _
    $region11: #{tpu_custom_call.1} parent=1 // pred_check_branch
      %25 = sbr.rel (0) target = $region13
    $region12: #{tpu_custom_call.1} parent=1 // pred_region
      _
    $region13: #{tpu_custom_call.1} parent=1 // pred_fallthru
      _
    // Predicated region
    $region14: #{tpu_custom_call.1} parent=1 // pred_check
      _
    $region15: #{tpu_custom_call.1} parent=1 // pred_check_branch
      %27 = sbr.rel (0) target = $region17
    $region16: #{tpu_custom_call.1} parent=1 // pred_region
      %28 = dma.done [#allocation3], 2688
    $region17: #{tpu_custom_call.1} parent=1 // pred_fallthru
      _
    %v29 = vld [vmem:[%s0] sm:$0xff]
    %v30 = vld [vmem:[%s0 + $0x8] sm:$0xff]
    %v31 = vld [vmem:[#allocation2 + $0xa0] sm:$0xff]
    %v32 = vld [vmem:[#allocation2 + $0x60] sm:$0xff]
    %v33 = vld [vmem:[#allocation2 + $0x68] sm:$0xff]
    %v34 = vld [vmem:[#allocation2 + $0x70] sm:$0xff]
    %v35 = vld [vmem:[#allocation2 + $0x78] sm:$0xff]
    %v36 = vld [vmem:[#allocation2 + $0x80] sm:$0xff]
    %v37 = vld [vmem:[#allocation2 + $0x88] sm:$0xff]
    %v38 = vld [vmem:[#allocation2 + $0x90] sm:$0xff]
    %v39 = vld [vmem:[#allocation2 + $0x98] sm:$0xff]
    %vm40 = vcmask 261120
    %v41 = vsel %vm40, %v29, 0.0
    %42 = vadd.xlane.f32.xlu0 %v41
    %v43 = vpop.xlane.xlu0 %42
    %v44 = vsel %vm40, %v30, 0.0
    %45 = vadd.xlane.f32.xlu0 %v44
    %v46 = vpop.xlane.xlu0 %45
    %v47 = vmul.f32 %v29, %v29
    %v48 = vmul.f32 %v30, %v30
    %v49 = vsel %vm40, %v47, 0.0
    %50 = vadd.xlane.f32.xlu0 %v49
    %v51 = vpop.xlane.xlu0 %50
    %v52 = vsel %vm40, %v48, 0.0
    %53 = vadd.xlane.f32.xlu0 %v52
    %v54 = vpop.xlane.xlu0 %53
    %v55 = vmul.f32 %v43, 0.03125
    %v56 = vmul.f32 %v46, 0.03125
    %v57 = vmul.f32 %v51, 0.03125
    %v58 = vmul.f32 %v54, 0.03125
    %v59 = vmul.f32 %v55, %v55
    %v60 = vmul.f32 %v56, %v56
    %v61 = vsub.f32 %v57, %v59
    %v62 = vsub.f32 %v58, %v60
    %v63 = vsub.f32 %v29, %v55
    %v64 = vsub.f32 %v30, %v56
    %v65 = vadd.f32 %v61, 1e-05
    %v66 = vadd.f32 %v62, 1e-05
    %v67 = vrsqrt.pop %v65
    %v68 = vrsqrt.pop %v66
    %v69 = vmul.f32 %v63, %v67
    %v70 = vmul.f32 %v64, %v68
    %v71 = vlaneseq
    %v72 = vshrl.u32 %v71, 7
    %v73 = vsub.s32 0, %v72
    %v74 = vrot.slane %v31, %v73
    %v75 = vmul.f32 %v69, %v74
    %v76 = vmul.f32 %v70, %v74
    %v77 = vlaneseq
    %v78 = vshrl.u32 %v77, 7
    %v79 = vsub.s32 1, %v78
    %v80 = vrot.slane %v31, %v79
    %v81 = vadd.f32 %v75, %v80
    %v82 = vadd.f32 %v76, %v80
    %v83 = vld [vmem:[#allocation2] sm:$0xff]
    %v84 = vld [vmem:[#allocation2 + $0x8] sm:$0xff]
    %v85 = vld [vmem:[#allocation2 + $0x10] sm:$0xff]
    %v86 = vld [vmem:[#allocation2 + $0x18] sm:$0xff]
    %v87 = vlaneseq
    %v88 = vshrl.u32 %v87, 7
    %v89 = vsub.s32 4, %v88
    %v90 = vrot.slane %v31, %v89
    %v92 = vsel %vm40, %v81, 0
    %v95 = vsel %vm40, %v82, 0
    %97 = vmatprep.subr.mxu0 0.0
    %98 = vmatpush1.msra.mxu0 %v83
    %99 = vmatprep.subr.mxu0 0.0
    %100 = vmatpush1.msra.mxu0 %v84
    %101 = vmatprep.subr.mxu0 0.0
    %102 = vmatpush1.msra.mxu0 %v85
    %103 = vmatprep.subr.mxu0 0.0
    %104 = vmatpush1.msra.mxu0 %v86
    %105 = vmatprep.subr.mxu0 0.0
    %106 = vmatpush1.msra.mxu0 0.0
    %107 = vmatprep.subr.mxu0 0.0
    %108 = vmatpush1.msra.mxu0 0.0
    %109 = vmatprep.subr.mxu0 0.0
    %110 = vmatpush1.msra.mxu0 0.0
    %111 = vmatprep.subr.mxu0 0.0
    %112 = vmatpush1.msra.mxu0 0.0
    %113 = vmatprep.subr.mxu0 0.0
    %114 = vmatpush1.msra.mxu0 0.0
    %115 = vmatprep.subr.mxu0 0.0
    %116 = vmatpush1.msra.mxu0 0.0
    %117 = vmatprep.subr.mxu0 0.0
    %118 = vmatpush1.msra.mxu0 0.0
    %119 = vmatprep.subr.mxu0 0.0
    %120 = vmatpush1.msra.mxu0 0.0
    %121 = vmatprep.subr.mxu0 0.0
    %122 = vmatpush1.msra.mxu0 0.0
    %123 = vmatprep.subr.mxu0 0.0
    %124 = vmatpush1.msra.mxu0 0.0
    %125 = vmatprep.subr.mxu0 0.0
    %126 = vmatpush1.msra.mxu0 0.0
    %127 = vmatprep.subr.mxu0 0.0
    %128 = vmatpush1.msra.mxu0 0.0
    %129 = vmatprep.subr.mxu0 0.0
    %130 = vmatpush1.msra.mxu0 0.0
    %131 = vmatprep.subr.mxu0 0.0
    %132 = vmatpush1.msra.mxu0 0.0
    %133 = vmatprep.subr.mxu0 0.0
    %134 = vmatpush1.msra.mxu0 0.0
    %135 = vmatprep.subr.mxu0 0.0
    %136 = vmatpush1.msra.mxu0 0.0
    %137 = vmatprep.subr.mxu0 0.0
    %138 = vmatpush1.msra.mxu0 0.0
    %139 = vmatprep.subr.mxu0 0.0
    %140 = vmatpush1.msra.mxu0 0.0
    %141 = vmatprep.subr.mxu0 0.0
    %142 = vmatpush1.msra.mxu0 0.0
    %143 = vmatprep.subr.mxu0 0.0
    %144 = vmatpush1.msra.mxu0 0.0
    %145 = vmatprep.subr.mxu0 0.0
    %146 = vmatpush1.msra.mxu0 0.0
    %147 = vmatprep.subr.mxu0 0.0
    %148 = vmatpush1.msra.mxu0 0.0
    %149 = vmatprep.subr.mxu0 0.0
    %150 = vmatpush1.msra.mxu0 0.0
    %151 = vmatprep.subr.mxu0 0.0
    %152 = vmatpush1.msra.mxu0 0.0
    %153 = vmatprep.subr.mxu0 0.0
    %154 = vmatpush1.msra.mxu0 0.0
    %155 = vmatprep.subr.mxu0 0.0
    %156 = vmatpush1.msra.mxu0 0.0
    %157 = vmatprep.subr.mxu0 0.0
    %158 = vmatpush1.msra.mxu0 0.0
    %159 = vmatprep.subr.mxu0 0.0
    %160 = vmatpush1.msra.mxu0 0.0
    %161 = vmatprep.mubr.f32.mxu0 0.0
    %162 = vmatmul.mubr.f32.gmra.mrb[0].mxu0 %v92
    %v163 = vpop.f32.mrb[0].mxu0
    %v164 = vadd.f32 %v90, %v163
    %v165 = vpop.f32.mrb[0].mxu0
    %166 = vmatprep.mubr.f32.mxu0 0.0
    %167 = vmatmul.mubr.f32.gmra.mrb[0].mxu0 %v95
    %v168 = vpop.f32.mrb[0].mxu0
    %v169 = vadd.f32 %v90, %v168
    %v170 = vpop.f32.mrb[0].mxu0
    %171 = vdwg.mxu0
    %v172 = vmul.f32 %v164, %v32
    %v173 = vmul.f32 %v164, %v33
    %v174 = vmul.f32 %v164, %v34
    %v175 = vmul.f32 %v164, %v35
    %v176 = vmul.f32 %v169, %v32
    %v177 = vmul.f32 %v169, %v33
    %v178 = vmul.f32 %v169, %v34
    %v179 = vmul.f32 %v169, %v35
    %181 = vrot.lane.b32.xlu0 %v164, 96
    %v182 = vpop.permute.xlu0 %181
    %v184 = vsel %vm40, %v172, 0
    %v187 = vsel %vm40, %v173, 0
    %v190 = vsel %vm40, %v174, 0
    %v193 = vsel %vm40, %v175, 0
    %v195 = vsel %vm40, %v182, 0
    %197 = vmatprep.subr.mxu0 0.0
    %198 = vmatpush1.xpose.msra.mxu0 %v195
    %199 = vmatprep.subr.mxu0 0.0
    %200 = vmatpush1.xpose.msra.mxu0 0.0
    %201 = vmatprep.subr.mxu0 0.0
    %202 = vmatpush1.xpose.msra.mxu0 0.0
    %203 = vmatprep.subr.mxu0 0.0
    %204 = vmatpush1.xpose.msra.mxu0 0.0
    %205 = vmatprep.subr.mxu0 0.0
    %206 = vmatpush1.xpose.msra.mxu0 0.0
    %207 = vmatprep.subr.mxu0 0.0
    %208 = vmatpush1.xpose.msra.mxu0 0.0
    %209 = vmatprep.subr.mxu0 0.0
    %210 = vmatpush1.xpose.msra.mxu0 0.0
    %211 = vmatprep.subr.mxu0 0.0
    %212 = vmatpush1.xpose.msra.mxu0 0.0
    %213 = vmatprep.subr.mxu0 0.0
    %214 = vmatpush1.xpose.msra.mxu0 0.0
    %215 = vmatprep.subr.mxu0 0.0
    %216 = vmatpush1.xpose.msra.mxu0 0.0
    %217 = vmatprep.subr.mxu0 0.0
    %218 = vmatpush1.xpose.msra.mxu0 0.0
    %219 = vmatprep.subr.mxu0 0.0
    %220 = vmatpush1.xpose.msra.mxu0 0.0
    %221 = vmatprep.subr.mxu0 0.0
    %222 = vmatpush1.xpose.msra.mxu0 0.0
    %223 = vmatprep.subr.mxu0 0.0
    %224 = vmatpush1.xpose.msra.mxu0 0.0
    %225 = vmatprep.subr.mxu0 0.0
    %226 = vmatpush1.xpose.msra.mxu0 0.0
    %227 = vmatprep.subr.mxu0 0.0
    %228 = vmatpush1.xpose.msra.mxu0 0.0
    %229 = vmatprep.subr.mxu0 0.0
    %230 = vmatpush1.xpose.msra.mxu0 0.0
    %231 = vmatprep.subr.mxu0 0.0
    %232 = vmatpush1.xpose.msra.mxu0 0.0
    %233 = vmatprep.subr.mxu0 0.0
    %234 = vmatpush1.xpose.msra.mxu0 0.0
    %235 = vmatprep.subr.mxu0 0.0
    %236 = vmatpush1.xpose.msra.mxu0 0.0
    %237 = vmatprep.subr.mxu0 0.0
    %238 = vmatpush1.xpose.msra.mxu0 0.0
    %239 = vmatprep.subr.mxu0 0.0
    %240 = vmatpush1.xpose.msra.mxu0 0.0
    %241 = vmatprep.subr.mxu0 0.0
    %242 = vmatpush1.xpose.msra.mxu0 0.0
    %243 = vmatprep.subr.mxu0 0.0
    %244 = vmatpush1.xpose.msra.mxu0 0.0
    %245 = vmatprep.subr.mxu0 0.0
    %246 = vmatpush1.xpose.msra.mxu0 0.0
    %247 = vmatprep.subr.mxu0 0.0
    %248 = vmatpush1.xpose.msra.mxu0 0.0
    %249 = vmatprep.subr.mxu0 0.0
    %250 = vmatpush1.xpose.msra.mxu0 0.0
    %251 = vmatprep.subr.mxu0 0.0
    %252 = vmatpush1.xpose.msra.mxu0 0.0
    %253 = vmatprep.subr.mxu0 0.0
    %254 = vmatpush1.xpose.msra.mxu0 0.0
    %255 = vmatprep.subr.mxu0 0.0
    %256 = vmatpush1.xpose.msra.mxu0 0.0
    %257 = vmatprep.subr.mxu0 0.0
    %258 = vmatpush1.xpose.msra.mxu0 0.0
    %259 = vmatprep.subr.mxu0 0.0
    %260 = vmatpush1.xpose.msra.mxu0 0.0
    %261 = vmatprep.mubr.f32.mxu0 0.0
    %262 = vmatmul.mubr.f32.gmra.mrb[0].mxu0 %v184
    %v263 = vpop.f32.mrb[0].mxu0
    %v264 = vadd.f32 %v36, %v263
    %v265 = vpop.f32.mrb[0].mxu0
    %266 = vmatprep.mubr.f32.mxu0 0.0
    %267 = vmatmul.mubr.f32.gmra.mrb[0].mxu0 %v187
    %v268 = vpop.f32.mrb[0].mxu0
    %v269 = vadd.f32 %v37, %v268
    %v270 = vpop.f32.mrb[0].mxu0
    %271 = vmatprep.mubr.f32.mxu0 0.0
    %272 = vmatmul.mubr.f32.gmra.mrb[0].mxu0 %v190
    %v273 = vpop.f32.mrb[0].mxu0
    %v274 = vadd.f32 %v38, %v273
    %v275 = vpop.f32.mrb[0].mxu0
    %276 = vmatprep.mubr.f32.mxu0 0.0
    %277 = vmatmul.mubr.f32.gmra.mrb[0].mxu0 %v193
    %v278 = vpop.f32.mrb[0].mxu0
    %v279 = vadd.f32 %v39, %v278
    %v280 = vpop.f32.mrb[0].mxu0
    %281 = vdwg.mxu0
    %283 = vrot.lane.b32.xlu0 %v169, 96
    %v284 = vpop.permute.xlu0 %283
    %v286 = vsel %vm40, %v176, 0
    %v289 = vsel %vm40, %v177, 0
    %v292 = vsel %vm40, %v178, 0
    %v295 = vsel %vm40, %v179, 0
    %v297 = vsel %vm40, %v284, 0
    %299 = vmatprep.subr.mxu0 0.0
    %300 = vmatpush1.xpose.msra.mxu0 %v297
    %301 = vmatprep.subr.mxu0 0.0
    %302 = vmatpush1.xpose.msra.mxu0 0.0
    %303 = vmatprep.subr.mxu0 0.0
    %304 = vmatpush1.xpose.msra.mxu0 0.0
    %305 = vmatprep.subr.mxu0 0.0
    %306 = vmatpush1.xpose.msra.mxu0 0.0
    %307 = vmatprep.subr.mxu0 0.0
    %308 = vmatpush1.xpose.msra.mxu0 0.0
    %309 = vmatprep.subr.mxu0 0.0
    %310 = vmatpush1.xpose.msra.mxu0 0.0
    %311 = vmatprep.subr.mxu0 0.0
    %312 = vmatpush1.xpose.msra.mxu0 0.0
    %313 = vmatprep.subr.mxu0 0.0
    %314 = vmatpush1.xpose.msra.mxu0 0.0
    %315 = vmatprep.subr.mxu0 0.0
    %316 = vmatpush1.xpose.msra.mxu0 0.0
    %317 = vmatprep.subr.mxu0 0.0
    %318 = vmatpush1.xpose.msra.mxu0 0.0
    %319 = vmatprep.subr.mxu0 0.0
    %320 = vmatpush1.xpose.msra.mxu0 0.0
    %321 = vmatprep.subr.mxu0 0.0
    %322 = vmatpush1.xpose.msra.mxu0 0.0
    %323 = vmatprep.subr.mxu0 0.0
    %324 = vmatpush1.xpose.msra.mxu0 0.0
    %325 = vmatprep.subr.mxu0 0.0
    %326 = vmatpush1.xpose.msra.mxu0 0.0
    %327 = vmatprep.subr.mxu0 0.0
    %328 = vmatpush1.xpose.msra.mxu0 0.0
    %329 = vmatprep.subr.mxu0 0.0
    %330 = vmatpush1.xpose.msra.mxu0 0.0
    %331 = vmatprep.subr.mxu0 0.0
    %332 = vmatpush1.xpose.msra.mxu0 0.0
    %333 = vmatprep.subr.mxu0 0.0
    %334 = vmatpush1.xpose.msra.mxu0 0.0
    %335 = vmatprep.subr.mxu0 0.0
    %336 = vmatpush1.xpose.msra.mxu0 0.0
    %337 = vmatprep.subr.mxu0 0.0
    %338 = vmatpush1.xpose.msra.mxu0 0.0
    %339 = vmatprep.subr.mxu0 0.0
    %340 = vmatpush1.xpose.msra.mxu0 0.0
    %341 = vmatprep.subr.mxu0 0.0
    %342 = vmatpush1.xpose.msra.mxu0 0.0
    %343 = vmatprep.subr.mxu0 0.0
    %344 = vmatpush1.xpose.msra.mxu0 0.0
    %345 = vmatprep.subr.mxu0 0.0
    %346 = vmatpush1.xpose.msra.mxu0 0.0
    %347 = vmatprep.subr.mxu0 0.0
    %348 = vmatpush1.xpose.msra.mxu0 0.0
    %349 = vmatprep.subr.mxu0 0.0
    %350 = vmatpush1.xpose.msra.mxu0 0.0
    %351 = vmatprep.subr.mxu0 0.0
    %352 = vmatpush1.xpose.msra.mxu0 0.0
    %353 = vmatprep.subr.mxu0 0.0
    %354 = vmatpush1.xpose.msra.mxu0 0.0
    %355 = vmatprep.subr.mxu0 0.0
    %356 = vmatpush1.xpose.msra.mxu0 0.0
    %357 = vmatprep.subr.mxu0 0.0
    %358 = vmatpush1.xpose.msra.mxu0 0.0
    %359 = vmatprep.subr.mxu0 0.0
    %360 = vmatpush1.xpose.msra.mxu0 0.0
    %361 = vmatprep.subr.mxu0 0.0
    %362 = vmatpush1.xpose.msra.mxu0 0.0
    %363 = vmatprep.mubr.f32.mxu0 0.0
    %364 = vmatmul.mubr.f32.gmra.mrb[0].mxu0 %v286
    %v365 = vpop.f32.mrb[0].mxu0
    %v366 = vadd.f32 %v36, %v365
    %v367 = vpop.f32.mrb[0].mxu0
    %368 = vmatprep.mubr.f32.mxu0 0.0
    %369 = vmatmul.mubr.f32.gmra.mrb[0].mxu0 %v289
    %v370 = vpop.f32.mrb[0].mxu0
    %v371 = vadd.f32 %v37, %v370
    %v372 = vpop.f32.mrb[0].mxu0
    %373 = vmatprep.mubr.f32.mxu0 0.0
    %374 = vmatmul.mubr.f32.gmra.mrb[0].mxu0 %v292
    %v375 = vpop.f32.mrb[0].mxu0
    %v376 = vadd.f32 %v38, %v375
    %v377 = vpop.f32.mrb[0].mxu0
    %378 = vmatprep.mubr.f32.mxu0 0.0
    %379 = vmatmul.mubr.f32.gmra.mrb[0].mxu0 %v295
    %v380 = vpop.f32.mrb[0].mxu0
    %v381 = vadd.f32 %v39, %v380
    %v382 = vpop.f32.mrb[0].mxu0
    %383 = vdwg.mxu0
    %vm384 = vcmask 64512
    %v385 = vsel %vm384, %v264, -inf
    %386 = vmax.xlane.f32.xlu0 %v385
    %v387 = vpop.xlane.xlu0 %386
    %v388 = vsel %vm384, %v269, -inf
    %389 = vmax.xlane.f32.xlu0 %v388
    %v390 = vpop.xlane.xlu0 %389
    %v391 = vsel %vm384, %v274, -inf
    %392 = vmax.xlane.f32.xlu0 %v391
    %v393 = vpop.xlane.xlu0 %392
    %v394 = vsel %vm384, %v279, -inf
    %395 = vmax.xlane.f32.xlu0 %v394
    %v396 = vpop.xlane.xlu0 %395
    %v397 = vsel %vm384, %v366, -inf
    %398 = vmax.xlane.f32.xlu0 %v397
    %v399 = vpop.xlane.xlu0 %398
    %v400 = vsel %vm384, %v371, -inf
    %401 = vmax.xlane.f32.xlu0 %v400
    %v402 = vpop.xlane.xlu0 %401
    %v403 = vsel %vm384, %v376, -inf
    %404 = vmax.xlane.f32.xlu0 %v403
    %v405 = vpop.xlane.xlu0 %404
    %v406 = vsel %vm384, %v381, -inf
    %407 = vmax.xlane.f32.xlu0 %v406
    %v408 = vpop.xlane.xlu0 %407
    %v409 = vsub.f32 %v264, %v387
    %v410 = vsub.f32 %v269, %v390
    %v411 = vsub.f32 %v274, %v393
    %v412 = vsub.f32 %v279, %v396
    %v413 = vsub.f32 %v366, %v399
    %v414 = vsub.f32 %v371, %v402
    %v415 = vsub.f32 %v376, %v405
    %v416 = vsub.f32 %v381, %v408
    %v417 = vmul.f32 %v409, 1.442695
    %v418 = vpow.pop %v417
    %v419 = vmul.f32 %v410, 1.442695
    %v420 = vpow.pop %v419
    %v421 = vmul.f32 %v411, 1.442695
    %v422 = vpow.pop %v421
    %v423 = vmul.f32 %v412, 1.442695
    %v424 = vpow.pop %v423
    %v425 = vmul.f32 %v413, 1.442695
    %v426 = vpow.pop %v425
    %v427 = vmul.f32 %v414, 1.442695
    %v428 = vpow.pop %v427
    %v429 = vmul.f32 %v415, 1.442695
    %v430 = vpow.pop %v429
    %v431 = vmul.f32 %v416, 1.442695
    %v432 = vpow.pop %v431
    %v433 = vsel %vm384, %v418, 0.0
    %434 = vadd.xlane.f32.xlu0 %v433
    %v435 = vpop.xlane.xlu0 %434
    %v436 = vsel %vm384, %v420, 0.0
    %437 = vadd.xlane.f32.xlu0 %v436
    %v438 = vpop.xlane.xlu0 %437
    %v439 = vsel %vm384, %v422, 0.0
    %440 = vadd.xlane.f32.xlu0 %v439
    %v441 = vpop.xlane.xlu0 %440
    %v442 = vsel %vm384, %v424, 0.0
    %443 = vadd.xlane.f32.xlu0 %v442
    %v444 = vpop.xlane.xlu0 %443
    %v445 = vsel %vm384, %v426, 0.0
    %446 = vadd.xlane.f32.xlu0 %v445
    %v447 = vpop.xlane.xlu0 %446
    %v448 = vsel %vm384, %v428, 0.0
    %449 = vadd.xlane.f32.xlu0 %v448
    %v450 = vpop.xlane.xlu0 %449
    %v451 = vsel %vm384, %v430, 0.0
    %452 = vadd.xlane.f32.xlu0 %v451
    %v453 = vpop.xlane.xlu0 %452
    %v454 = vsel %vm384, %v432, 0.0
    %455 = vadd.xlane.f32.xlu0 %v454
    %v456 = vpop.xlane.xlu0 %455
    %v457 = vrcp.pop %v435
    %v458 = vrcp.pop %v438
    %v459 = vrcp.pop %v441
    %v460 = vrcp.pop %v444
    %v461 = vrcp.pop %v447
    %v462 = vrcp.pop %v450
    %v463 = vrcp.pop %v453
    %v464 = vrcp.pop %v456
    %v465 = vmul.f32 %v418, %v457
    %v466 = vmul.f32 %v420, %v458
    %v467 = vmul.f32 %v422, %v459
    %v468 = vmul.f32 %v424, %v460
    %v469 = vmul.f32 %v426, %v461
    %v470 = vmul.f32 %v428, %v462
    %v471 = vmul.f32 %v430, %v463
    %v472 = vmul.f32 %v432, %v464
    %473 = vrot.lane.b32.xlu0 %v164, 64
    %v474 = vpop.permute.xlu0 %473
    %v477 = vsel %vm384, %v465, 0
    %v480 = vsel %vm384, %v466, 0
    %v483 = vsel %vm384, %v467, 0
    %v486 = vsel %vm384, %v468, 0
    %488 = vmatprep.subr.mxu0 0.0
    %489 = vmatpush1.msra.mxu0 %v474
    %490 = vmatprep.subr.mxu0 0.0
    %491 = vmatpush1.msra.mxu0 0.0
    %492 = vmatprep.subr.mxu0 0.0
    %493 = vmatpush1.msra.mxu0 0.0
    %494 = vmatprep.subr.mxu0 0.0
    %495 = vmatpush1.msra.mxu0 0.0
    %496 = vmatprep.subr.mxu0 0.0
    %497 = vmatpush1.msra.mxu0 0.0
    %498 = vmatprep.subr.mxu0 0.0
    %499 = vmatpush1.msra.mxu0 0.0
    %500 = vmatprep.subr.mxu0 0.0
    %501 = vmatpush1.msra.mxu0 0.0
    %502 = vmatprep.subr.mxu0 0.0
    %503 = vmatpush1.msra.mxu0 0.0
    %504 = vmatprep.subr.mxu0 0.0
    %505 = vmatpush1.msra.mxu0 0.0
    %506 = vmatprep.subr.mxu0 0.0
    %507 = vmatpush1.msra.mxu0 0.0
    %508 = vmatprep.subr.mxu0 0.0
    %509 = vmatpush1.msra.mxu0 0.0
    %510 = vmatprep.subr.mxu0 0.0
    %511 = vmatpush1.msra.mxu0 0.0
    %512 = vmatprep.subr.mxu0 0.0
    %513 = vmatpush1.msra.mxu0 0.0
    %514 = vmatprep.subr.mxu0 0.0
    %515 = vmatpush1.msra.mxu0 0.0
    %516 = vmatprep.subr.mxu0 0.0
    %517 = vmatpush1.msra.mxu0 0.0
    %518 = vmatprep.subr.mxu0 0.0
    %519 = vmatpush1.msra.mxu0 0.0
    %520 = vmatprep.subr.mxu0 0.0
    %521 = vmatpush1.msra.mxu0 0.0
    %522 = vmatprep.subr.mxu0 0.0
    %523 = vmatpush1.msra.mxu0 0.0
    %524 = vmatprep.subr.mxu0 0.0
    %525 = vmatpush1.msra.mxu0 0.0
    %526 = vmatprep.subr.mxu0 0.0
    %527 = vmatpush1.msra.mxu0 0.0
    %528 = vmatprep.subr.mxu0 0.0
    %529 = vmatpush1.msra.mxu0 0.0
    %530 = vmatprep.subr.mxu0 0.0
    %531 = vmatpush1.msra.mxu0 0.0
    %532 = vmatprep.subr.mxu0 0.0
    %533 = vmatpush1.msra.mxu0 0.0
    %534 = vmatprep.subr.mxu0 0.0
    %535 = vmatpush1.msra.mxu0 0.0
    %536 = vmatprep.subr.mxu0 0.0
    %537 = vmatpush1.msra.mxu0 0.0
    %538 = vmatprep.subr.mxu0 0.0
    %539 = vmatpush1.msra.mxu0 0.0
    %540 = vmatprep.subr.mxu0 0.0
    %541 = vmatpush1.msra.mxu0 0.0
    %542 = vmatprep.subr.mxu0 0.0
    %543 = vmatpush1.msra.mxu0 0.0
    %544 = vmatprep.subr.mxu0 0.0
    %545 = vmatpush1.msra.mxu0 0.0
    %546 = vmatprep.subr.mxu0 0.0
    %547 = vmatpush1.msra.mxu0 0.0
    %548 = vmatprep.subr.mxu0 0.0
    %549 = vmatpush1.msra.mxu0 0.0
    %550 = vmatprep.subr.mxu0 0.0
    %551 = vmatpush1.msra.mxu0 0.0
    %552 = vmatprep.mubr.f32.mxu0 0.0
    %553 = vmatmul.mubr.f32.gmra.mrb[0].mxu0 %v477
    %v554 = vpop.f32.mrb[0].mxu0
    %v555 = vadd.f32 0.0, %v554
    %v556 = vpop.f32.mrb[0].mxu0
    %557 = vmatprep.mubr.f32.mxu0 0.0
    %558 = vmatmul.mubr.f32.gmra.mrb[0].mxu0 %v480
    %v559 = vpop.f32.mrb[0].mxu0
    %v560 = vadd.f32 0.0, %v559
    %v561 = vpop.f32.mrb[0].mxu0
    %562 = vmatprep.mubr.f32.mxu0 0.0
    %563 = vmatmul.mubr.f32.gmra.mrb[0].mxu0 %v483
    %v564 = vpop.f32.mrb[0].mxu0
    %v565 = vadd.f32 0.0, %v564
    %v566 = vpop.f32.mrb[0].mxu0
    %567 = vmatprep.mubr.f32.mxu0 0.0
    %568 = vmatmul.mubr.f32.gmra.mrb[0].mxu0 %v486
    %v569 = vpop.f32.mrb[0].mxu0
    %v570 = vadd.f32 0.0, %v569
    %v571 = vpop.f32.mrb[0].mxu0
    %572 = vdwg.mxu0
    %573 = vrot.lane.b32.xlu0 %v169, 64
    %v574 = vpop.permute.xlu0 %573
    %v577 = vsel %vm384, %v469, 0
    %v580 = vsel %vm384, %v470, 0
    %v583 = vsel %vm384, %v471, 0
    %v586 = vsel %vm384, %v472, 0
    %588 = vmatprep.subr.mxu0 0.0
    %589 = vmatpush1.msra.mxu0 %v574
    %590 = vmatprep.subr.mxu0 0.0
    %591 = vmatpush1.msra.mxu0 0.0
    %592 = vmatprep.subr.mxu0 0.0
    %593 = vmatpush1.msra.mxu0 0.0
    %594 = vmatprep.subr.mxu0 0.0
    %595 = vmatpush1.msra.mxu0 0.0
    %596 = vmatprep.subr.mxu0 0.0
    %597 = vmatpush1.msra.mxu0 0.0
    %598 = vmatprep.subr.mxu0 0.0
    %599 = vmatpush1.msra.mxu0 0.0
    %600 = vmatprep.subr.mxu0 0.0
    %601 = vmatpush1.msra.mxu0 0.0
    %602 = vmatprep.subr.mxu0 0.0
    %603 = vmatpush1.msra.mxu0 0.0
    %604 = vmatprep.subr.mxu0 0.0
    %605 = vmatpush1.msra.mxu0 0.0
    %606 = vmatprep.subr.mxu0 0.0
    %607 = vmatpush1.msra.mxu0 0.0
    %608 = vmatprep.subr.mxu0 0.0
    %609 = vmatpush1.msra.mxu0 0.0
    %610 = vmatprep.subr.mxu0 0.0
    %611 = vmatpush1.msra.mxu0 0.0
    %612 = vmatprep.subr.mxu0 0.0
    %613 = vmatpush1.msra.mxu0 0.0
    %614 = vmatprep.subr.mxu0 0.0
    %615 = vmatpush1.msra.mxu0 0.0
    %616 = vmatprep.subr.mxu0 0.0
    %617 = vmatpush1.msra.mxu0 0.0
    %618 = vmatprep.subr.mxu0 0.0
    %619 = vmatpush1.msra.mxu0 0.0
    %620 = vmatprep.subr.mxu0 0.0
    %621 = vmatpush1.msra.mxu0 0.0
    %622 = vmatprep.subr.mxu0 0.0
    %623 = vmatpush1.msra.mxu0 0.0
    %624 = vmatprep.subr.mxu0 0.0
    %625 = vmatpush1.msra.mxu0 0.0
    %626 = vmatprep.subr.mxu0 0.0
    %627 = vmatpush1.msra.mxu0 0.0
    %628 = vmatprep.subr.mxu0 0.0
    %629 = vmatpush1.msra.mxu0 0.0
    %630 = vmatprep.subr.mxu0 0.0
    %631 = vmatpush1.msra.mxu0 0.0
    %632 = vmatprep.subr.mxu0 0.0
    %633 = vmatpush1.msra.mxu0 0.0
    %634 = vmatprep.subr.mxu0 0.0
    %635 = vmatpush1.msra.mxu0 0.0
    %636 = vmatprep.subr.mxu0 0.0
    %637 = vmatpush1.msra.mxu0 0.0
    %638 = vmatprep.subr.mxu0 0.0
    %639 = vmatpush1.msra.mxu0 0.0
    %640 = vmatprep.subr.mxu0 0.0
    %641 = vmatpush1.msra.mxu0 0.0
    %642 = vmatprep.subr.mxu0 0.0
    %643 = vmatpush1.msra.mxu0 0.0
    %644 = vmatprep.subr.mxu0 0.0
    %645 = vmatpush1.msra.mxu0 0.0
    %646 = vmatprep.subr.mxu0 0.0
    %647 = vmatpush1.msra.mxu0 0.0
    %648 = vmatprep.subr.mxu0 0.0
    %649 = vmatpush1.msra.mxu0 0.0
    %650 = vmatprep.subr.mxu0 0.0
    %651 = vmatpush1.msra.mxu0 0.0
    %652 = vmatprep.mubr.f32.mxu0 0.0
    %653 = vmatmul.mubr.f32.gmra.mrb[0].mxu0 %v577
    %v654 = vpop.f32.mrb[0].mxu0
    %v655 = vadd.f32 0.0, %v654
    %v656 = vpop.f32.mrb[0].mxu0
    %657 = vmatprep.mubr.f32.mxu0 0.0
    %658 = vmatmul.mubr.f32.gmra.mrb[0].mxu0 %v580
    %v659 = vpop.f32.mrb[0].mxu0
    %v660 = vadd.f32 0.0, %v659
    %v661 = vpop.f32.mrb[0].mxu0
    %662 = vmatprep.mubr.f32.mxu0 0.0
    %663 = vmatmul.mubr.f32.gmra.mrb[0].mxu0 %v583
    %v664 = vpop.f32.mrb[0].mxu0
    %v665 = vadd.f32 0.0, %v664
    %v666 = vpop.f32.mrb[0].mxu0
    %667 = vmatprep.mubr.f32.mxu0 0.0
    %668 = vmatmul.mubr.f32.gmra.mrb[0].mxu0 %v586
    %v669 = vpop.f32.mrb[0].mxu0
    %v670 = vadd.f32 0.0, %v669
    %v671 = vpop.f32.mrb[0].mxu0
    %672 = vdwg.mxu0
    %v673 = vmul.f32 %v555, %v32
    %v674 = vmul.f32 %v560, %v33
    %v675 = vmul.f32 %v565, %v34
    %v676 = vmul.f32 %v570, %v35
    %v677 = vmul.f32 %v655, %v32
    %v678 = vmul.f32 %v660, %v33
    %v679 = vmul.f32 %v665, %v34
    %v680 = vmul.f32 %v670, %v35
    %v681 = vsel %vm40, %v673, 0.0
    %v682 = vsel %vm40, %v674, 0.0
    %v683 = vadd.f32 %v681, %v682
    %v684 = vsel %vm40, %v675, 0.0
    %v685 = vadd.f32 %v683, %v684
    %v686 = vsel %vm40, %v676, 0.0
    %v687 = vadd.f32 %v685, %v686
    %v688 = vsel %vm40, %v677, 0.0
    %v689 = vsel %vm40, %v678, 0.0
    %v690 = vadd.f32 %v688, %v689
    %v691 = vsel %vm40, %v679, 0.0
    %v692 = vadd.f32 %v690, %v691
    %v693 = vsel %vm40, %v680, 0.0
    %v694 = vadd.f32 %v692, %v693
    %v695 = vld [vmem:[#allocation2 + $0x20] sm:$0xff]
    %v696 = vld [vmem:[#allocation2 + $0x28] sm:$0xff]
    %v697 = vld [vmem:[#allocation2 + $0x30] sm:$0xff]
    %v698 = vld [vmem:[#allocation2 + $0x38] sm:$0xff]
    %v699 = vlaneseq
    %v700 = vshrl.u32 %v699, 7
    %v701 = vsub.s32 5, %v700
    %v702 = vrot.slane %v31, %v701
    %v704 = vsel %vm40, %v687, 0
    %v707 = vsel %vm40, %v694, 0
    %709 = vmatprep.subr.mxu0 0.0
    %710 = vmatpush1.msra.mxu0 %v695
    %711 = vmatprep.subr.mxu0 0.0
    %712 = vmatpush1.msra.mxu0 %v696
    %713 = vmatprep.subr.mxu0 0.0
    %714 = vmatpush1.msra.mxu0 %v697
    %715 = vmatprep.subr.mxu0 0.0
    %716 = vmatpush1.msra.mxu0 %v698
    %717 = vmatprep.subr.mxu0 0.0
    %718 = vmatpush1.msra.mxu0 0.0
    %719 = vmatprep.subr.mxu0 0.0
    %720 = vmatpush1.msra.mxu0 0.0
    %721 = vmatprep.subr.mxu0 0.0
    %722 = vmatpush1.msra.mxu0 0.0
    %723 = vmatprep.subr.mxu0 0.0
    %724 = vmatpush1.msra.mxu0 0.0
    %725 = vmatprep.subr.mxu0 0.0
    %726 = vmatpush1.msra.mxu0 0.0
    %727 = vmatprep.subr.mxu0 0.0
    %728 = vmatpush1.msra.mxu0 0.0
    %729 = vmatprep.subr.mxu0 0.0
    %730 = vmatpush1.msra.mxu0 0.0
    %731 = vmatprep.subr.mxu0 0.0
    %732 = vmatpush1.msra.mxu0 0.0
    %733 = vmatprep.subr.mxu0 0.0
    %734 = vmatpush1.msra.mxu0 0.0
    %735 = vmatprep.subr.mxu0 0.0
    %736 = vmatpush1.msra.mxu0 0.0
    %737 = vmatprep.subr.mxu0 0.0
    %738 = vmatpush1.msra.mxu0 0.0
    %739 = vmatprep.subr.mxu0 0.0
    %740 = vmatpush1.msra.mxu0 0.0
    %741 = vmatprep.subr.mxu0 0.0
    %742 = vmatpush1.msra.mxu0 0.0
    %743 = vmatprep.subr.mxu0 0.0
    %744 = vmatpush1.msra.mxu0 0.0
    %745 = vmatprep.subr.mxu0 0.0
    %746 = vmatpush1.msra.mxu0 0.0
    %747 = vmatprep.subr.mxu0 0.0
    %748 = vmatpush1.msra.mxu0 0.0
    %749 = vmatprep.subr.mxu0 0.0
    %750 = vmatpush1.msra.mxu0 0.0
    %751 = vmatprep.subr.mxu0 0.0
    %752 = vmatpush1.msra.mxu0 0.0
    %753 = vmatprep.subr.mxu0 0.0
    %754 = vmatpush1.msra.mxu0 0.0
    %755 = vmatprep.subr.mxu0 0.0
    %756 = vmatpush1.msra.mxu0 0.0
    %757 = vmatprep.subr.mxu0 0.0
    %758 = vmatpush1.msra.mxu0 0.0
    %759 = vmatprep.subr.mxu0 0.0
    %760 = vmatpush1.msra.mxu0 0.0
    %761 = vmatprep.subr.mxu0 0.0
    %762 = vmatpush1.msra.mxu0 0.0
    %763 = vmatprep.subr.mxu0 0.0
    %764 = vmatpush1.msra.mxu0 0.0
    %765 = vmatprep.subr.mxu0 0.0
    %766 = vmatpush1.msra.mxu0 0.0
    %767 = vmatprep.subr.mxu0 0.0
    %768 = vmatpush1.msra.mxu0 0.0
    %769 = vmatprep.subr.mxu0 0.0
    %770 = vmatpush1.msra.mxu0 0.0
    %771 = vmatprep.subr.mxu0 0.0
    %772 = vmatpush1.msra.mxu0 0.0
    %773 = vmatprep.mubr.f32.mxu0 0.0
    %774 = vmatmul.mubr.f32.gmra.mrb[0].mxu0 %v704
    %v775 = vpop.f32.mrb[0].mxu0
    %v776 = vadd.f32 %v702, %v775
    %v777 = vpop.f32.mrb[0].mxu0
    %778 = vmatprep.mubr.f32.mxu0 0.0
    %779 = vmatmul.mubr.f32.gmra.mrb[0].mxu0 %v707
    %v780 = vpop.f32.mrb[0].mxu0
    %v781 = vadd.f32 %v702, %v780
    %v782 = vpop.f32.mrb[0].mxu0
    %783 = vdwg.mxu0
    %v784 = vadd.f32 %v29, %v776
    %v785 = vadd.f32 %v30, %v781
    %v786 = vsel %vm40, %v784, 0.0
    %787 = vadd.xlane.f32.xlu0 %v786
    %v788 = vpop.xlane.xlu0 %787
    %v789 = vsel %vm40, %v785, 0.0
    %790 = vadd.xlane.f32.xlu0 %v789
    %v791 = vpop.xlane.xlu0 %790
    %v792 = vmul.f32 %v784, %v784
    %v793 = vmul.f32 %v785, %v785
    %v794 = vsel %vm40, %v792, 0.0
    %795 = vadd.xlane.f32.xlu0 %v794
    %v796 = vpop.xlane.xlu0 %795
    %v797 = vsel %vm40, %v793, 0.0
    %798 = vadd.xlane.f32.xlu0 %v797
    %v799 = vpop.xlane.xlu0 %798
    %v800 = vmul.f32 %v788, 0.03125
    %v801 = vmul.f32 %v791, 0.03125
    %v802 = vmul.f32 %v796, 0.03125
    %v803 = vmul.f32 %v799, 0.03125
    %v804 = vmul.f32 %v800, %v800
    %v805 = vmul.f32 %v801, %v801
    %v806 = vsub.f32 %v802, %v804
    %v807 = vsub.f32 %v803, %v805
    %v808 = vsub.f32 %v784, %v800
    %v809 = vsub.f32 %v785, %v801
    %v810 = vadd.f32 %v806, 1e-05
    %v811 = vadd.f32 %v807, 1e-05
    %v812 = vrsqrt.pop %v810
    %v813 = vrsqrt.pop %v811
    %v814 = vmul.f32 %v808, %v812
    %v815 = vmul.f32 %v809, %v813
    %v816 = vlaneseq
    %v817 = vshrl.u32 %v816, 7
    %v818 = vsub.s32 2, %v817
    %v819 = vrot.slane %v31, %v818
    %v820 = vmul.f32 %v814, %v819
    %v821 = vmul.f32 %v815, %v819
    %v822 = vlaneseq
    %v823 = vshrl.u32 %v822, 7
    %v824 = vsub.s32 3, %v823
    %v825 = vrot.slane %v31, %v824
    %v826 = vadd.f32 %v820, %v825
    %v827 = vadd.f32 %v821, %v825
    %v828 = vld [vmem:[#allocation2 + $0x40] sm:$0xff]
    %v829 = vld [vmem:[#allocation2 + $0x48] sm:$0xff]
    %v830 = vld [vmem:[#allocation2 + $0x50] sm:$0xff]
    %v831 = vld [vmem:[#allocation2 + $0x58] sm:$0xff]
    %v832 = vlaneseq
    %v833 = vshrl.u32 %v832, 7
    %v834 = vsub.s32 6, %v833
    %v835 = vrot.slane %v31, %v834
    %v837 = vsel %vm40, %v826, 0
    %v840 = vsel %vm40, %v827, 0
    %842 = vmatprep.subr.mxu0 0.0
    %843 = vmatpush1.msra.mxu0 %v828
    %844 = vmatprep.subr.mxu0 0.0
    %845 = vmatpush1.msra.mxu0 %v829
    %846 = vmatprep.subr.mxu0 0.0
    %847 = vmatpush1.msra.mxu0 %v830
    %848 = vmatprep.subr.mxu0 0.0
    %849 = vmatpush1.msra.mxu0 %v831
    %850 = vmatprep.subr.mxu0 0.0
    %851 = vmatpush1.msra.mxu0 0.0
    %852 = vmatprep.subr.mxu0 0.0
    %853 = vmatpush1.msra.mxu0 0.0
    %854 = vmatprep.subr.mxu0 0.0
    %855 = vmatpush1.msra.mxu0 0.0
    %856 = vmatprep.subr.mxu0 0.0
    %857 = vmatpush1.msra.mxu0 0.0
    %858 = vmatprep.subr.mxu0 0.0
    %859 = vmatpush1.msra.mxu0 0.0
    %860 = vmatprep.subr.mxu0 0.0
    %861 = vmatpush1.msra.mxu0 0.0
    %862 = vmatprep.subr.mxu0 0.0
    %863 = vmatpush1.msra.mxu0 0.0
    %864 = vmatprep.subr.mxu0 0.0
    %865 = vmatpush1.msra.mxu0 0.0
    %866 = vmatprep.subr.mxu0 0.0
    %867 = vmatpush1.msra.mxu0 0.0
    %868 = vmatprep.subr.mxu0 0.0
    %869 = vmatpush1.msra.mxu0 0.0
    %870 = vmatprep.subr.mxu0 0.0
    %871 = vmatpush1.msra.mxu0 0.0
    %872 = vmatprep.subr.mxu0 0.0
    %873 = vmatpush1.msra.mxu0 0.0
    %874 = vmatprep.subr.mxu0 0.0
    %875 = vmatpush1.msra.mxu0 0.0
    %876 = vmatprep.subr.mxu0 0.0
    %877 = vmatpush1.msra.mxu0 0.0
    %878 = vmatprep.subr.mxu0 0.0
    %879 = vmatpush1.msra.mxu0 0.0
    %880 = vmatprep.subr.mxu0 0.0
    %881 = vmatpush1.msra.mxu0 0.0
    %882 = vmatprep.subr.mxu0 0.0
    %883 = vmatpush1.msra.mxu0 0.0
    %884 = vmatprep.subr.mxu0 0.0
    %885 = vmatpush1.msra.mxu0 0.0
    %886 = vmatprep.subr.mxu0 0.0
    %887 = vmatpush1.msra.mxu0 0.0
    %888 = vmatprep.subr.mxu0 0.0
    %889 = vmatpush1.msra.mxu0 0.0
    %890 = vmatprep.subr.mxu0 0.0
    %891 = vmatpush1.msra.mxu0 0.0
    %892 = vmatprep.subr.mxu0 0.0
    %893 = vmatpush1.msra.mxu0 0.0
    %894 = vmatprep.subr.mxu0 0.0
    %895 = vmatpush1.msra.mxu0 0.0
    %896 = vmatprep.subr.mxu0 0.0
    %897 = vmatpush1.msra.mxu0 0.0
    %898 = vmatprep.subr.mxu0 0.0
    %899 = vmatpush1.msra.mxu0 0.0
    %900 = vmatprep.subr.mxu0 0.0
    %901 = vmatpush1.msra.mxu0 0.0
    %902 = vmatprep.subr.mxu0 0.0
    %903 = vmatpush1.msra.mxu0 0.0
    %904 = vmatprep.subr.mxu0 0.0
    %905 = vmatpush1.msra.mxu0 0.0
    %906 = vmatprep.mubr.f32.mxu0 0.0
    %907 = vmatmul.mubr.f32.gmra.mrb[0].mxu0 %v837
    %v908 = vpop.f32.mrb[0].mxu0
    %v909 = vadd.f32 %v835, %v908
    %v910 = vpop.f32.mrb[0].mxu0
    %911 = vmatprep.mubr.f32.mxu0 0.0
    %912 = vmatmul.mubr.f32.gmra.mrb[0].mxu0 %v840
    %v913 = vpop.f32.mrb[0].mxu0
    %v914 = vadd.f32 %v835, %v913
    %v915 = vpop.f32.mrb[0].mxu0
    %916 = vdwg.mxu0
    %v917 = vmax.f32 %v909, 0.0
    %v918 = vmax.f32 %v914, 0.0
    %v919 = vld [vmem:[%s2] sm:$0xff]
    %v920 = vld [vmem:[%s2 + $0x8] sm:$0xff]
    %v921 = vld [vmem:[%s2 + $0x10] sm:$0xff]
    %v922 = vld [vmem:[%s2 + $0x18] sm:$0xff]
    %v923 = vld [vmem:[%s2 + $0x20] sm:$0xff]
    %v924 = vld [vmem:[%s2 + $0x28] sm:$0xff]
    %v925 = vld [vmem:[%s2 + $0x30] sm:$0xff]
    %v926 = vld [vmem:[%s2 + $0x38] sm:$0xff]
    %v927 = vld [vmem:[%s2 + $0x40] sm:$0xff]
    %v928 = vld [vmem:[%s2 + $0x48] sm:$0xff]
    %v929 = vld [vmem:[%s2 + $0x50] sm:$0xff]
    %v930 = vld [vmem:[%s2 + $0x58] sm:$0xff]
    %v931 = vld [vmem:[%s2 + $0x60] sm:$0xff]
    %v932 = vld [vmem:[%s2 + $0x68] sm:$0xff]
    %v933 = vld [vmem:[%s2 + $0x70] sm:$0xff]
    %v934 = vld [vmem:[%s2 + $0x78] sm:$0xff]
    %v935 = vlaneseq
    %v936 = vshrl.u32 %v935, 7
    %v937 = vsub.s32 7, %v936
    %v938 = vrot.slane %v31, %v937
    %939 = vmatprep.subr.mxu0 0.0
    %940 = vmatpush1.msra.mxu0 %v919
    %941 = vmatprep.subr.mxu0 0.0
    %942 = vmatpush1.msra.mxu0 %v920
    %943 = vmatprep.subr.mxu0 0.0
    %944 = vmatpush1.msra.mxu0 %v921
    %945 = vmatprep.subr.mxu0 0.0
    %946 = vmatpush1.msra.mxu0 %v922
    %947 = vmatprep.subr.mxu0 0.0
    %948 = vmatpush1.msra.mxu0 %v923
    %949 = vmatprep.subr.mxu0 0.0
    %950 = vmatpush1.msra.mxu0 %v924
    %951 = vmatprep.subr.mxu0 0.0
    %952 = vmatpush1.msra.mxu0 %v925
    %953 = vmatprep.subr.mxu0 0.0
    %954 = vmatpush1.msra.mxu0 %v926
    %955 = vmatprep.subr.mxu0 0.0
    %956 = vmatpush1.msra.mxu0 %v927
    %957 = vmatprep.subr.mxu0 0.0
    %958 = vmatpush1.msra.mxu0 %v928
    %959 = vmatprep.subr.mxu0 0.0
    %960 = vmatpush1.msra.mxu0 %v929
    %961 = vmatprep.subr.mxu0 0.0
    %962 = vmatpush1.msra.mxu0 %v930
    %963 = vmatprep.subr.mxu0 0.0
    %964 = vmatpush1.msra.mxu0 %v931
    %965 = vmatprep.subr.mxu0 0.0
    %966 = vmatpush1.msra.mxu0 %v932
    %967 = vmatprep.subr.mxu0 0.0
    %968 = vmatpush1.msra.mxu0 %v933
    %969 = vmatprep.subr.mxu0 0.0
    %970 = vmatpush1.msra.mxu0 %v934
    %971 = vmatprep.subr.mxu0 0.0
    %972 = vmatpush1.msra.mxu0 0.0
    %973 = vmatprep.subr.mxu0 0.0
    %974 = vmatpush1.msra.mxu0 0.0
    %975 = vmatprep.subr.mxu0 0.0
    %976 = vmatpush1.msra.mxu0 0.0
    %977 = vmatprep.subr.mxu0 0.0
    %978 = vmatpush1.msra.mxu0 0.0
    %979 = vmatprep.subr.mxu0 0.0
    %980 = vmatpush1.msra.mxu0 0.0
    %981 = vmatprep.subr.mxu0 0.0
    %982 = vmatpush1.msra.mxu0 0.0
    %983 = vmatprep.subr.mxu0 0.0
    %984 = vmatpush1.msra.mxu0 0.0
    %985 = vmatprep.subr.mxu0 0.0
    %986 = vmatpush1.msra.mxu0 0.0
    %987 = vmatprep.subr.mxu0 0.0
    %988 = vmatpush1.msra.mxu0 0.0
    %989 = vmatprep.subr.mxu0 0.0
    %990 = vmatpush1.msra.mxu0 0.0
    %991 = vmatprep.subr.mxu0 0.0
    %992 = vmatpush1.msra.mxu0 0.0
    %993 = vmatprep.subr.mxu0 0.0
    %994 = vmatpush1.msra.mxu0 0.0
    %995 = vmatprep.subr.mxu0 0.0
    %996 = vmatpush1.msra.mxu0 0.0
    %997 = vmatprep.subr.mxu0 0.0
    %998 = vmatpush1.msra.mxu0 0.0
    %999 = vmatprep.subr.mxu0 0.0
    %1000 = vmatpush1.msra.mxu0 0.0
    %1001 = vmatprep.subr.mxu0 0.0
    %1002 = vmatpush1.msra.mxu0 0.0
    %1003 = vmatprep.mubr.f32.mxu0 0.0
    %1004 = vmatmul.mubr.f32.gmra.mrb[0].mxu0 %v917
    %v1005 = vpop.f32.mrb[0].mxu0
    %v1006 = vadd.f32 %v938, %v1005
    %v1007 = vpop.f32.mrb[0].mxu0
    %1008 = vmatprep.mubr.f32.mxu0 0.0
    %1009 = vmatmul.mubr.f32.gmra.mrb[0].mxu0 %v918
    %v1010 = vpop.f32.mrb[0].mxu0
    %v1011 = vadd.f32 %v938, %v1010
    %v1012 = vpop.f32.mrb[0].mxu0
    %1013 = vdwg.mxu0
    %v1014 = vadd.f32 %v784, %v1006
    %v1015 = vadd.f32 %v785, %v1011
    %1016 = vst.msk [vmem:[#allocation5] sm:$0xff] %vm40, %v1014
    %1017 = vst.msk [vmem:[#allocation5 + $0x8] sm:$0xff] %vm40, %v1015
    // Predicated region
    $region18: #{tpu_custom_call.1} parent=1 // pred_check
      _
    $region19: #{tpu_custom_call.1} parent=1 // pred_check_branch
      %1019 = sbr.rel (0) target = $region21
    $region20: #{tpu_custom_call.1} parent=1 // pred_region
      %s1021 = ssub.s32 256, 256
      %1022 = vsyncadd [#allocation4], %s1021
      %s1023 = sshll.u32 [#allocation5], 4
      %s1024 = int_to_ptr.vmem [resolvable:$true] %s1023
      %1029 = dma.vmem_to_hbm [thread:$0]  %s1024, 256, %s3, [#allocation4], 128, 128, 8
    $region21: #{tpu_custom_call.1} parent=1 // pred_fallthru
      _
    // Predicated region
    $region22: #{tpu_custom_call.1} parent=1 // pred_check
      _
    $region23: #{tpu_custom_call.1} parent=1 // pred_check_branch
      %1031 = sbr.rel (0) target = $region25
    $region24: #{tpu_custom_call.1} parent=1 // pred_region
      %1032 = dma.done [#allocation4], 256
    $region25: #{tpu_custom_call.1} parent=1 // pred_fallthru
      _
    %1033 = vsyncpa [#allocation3], 1
    %1034 = vsyncpa [#allocation4], 1

</llo_original>
